<compile_context>
chip_gen: v6e
topology: v6e:2x2x1
jax: 0.10.0
libtpu: 0.0.40
codegen_flags: <defaults>
</compile_context>

<pallas_src>
import jax
import jax.numpy as jnp
from jax.experimental import pallas as pl
from jax.experimental.pallas import tpu as pltpu


_VMEM_FOOTPRINT_BUDGET = 40 * 2**20  # practical ceiling that fits every generation


def _gin_kernel(eps_ref, adj_ref, xw1_ref, w2_ref, b1_ref, b2_ref, bias_ref,
                o_ref):
    i = pl.program_id(0)
    k = pl.program_id(1)
    nk = pl.num_programs(1)
    tm = o_ref.shape[0]
    tk = adj_ref.shape[1]

    @pl.when(k == 0)
    def _():
        o_ref[...] = jnp.zeros_like(o_ref)

    # Aggregation partial sum: adj tile upcast (int8/f32 -> bf16) on the VPU,
    # bf16 MXU matmul, f32 accumulation directly into the resident output tile.
    adj_tile = adj_ref[...].astype(jnp.bfloat16)
    koff = pl.multiple_of(k * tk, tk)
    xw1_k = xw1_ref[pl.ds(koff, tk), :]            # VMEM-resident view, no DMA
    o_ref[...] += jnp.dot(adj_tile, xw1_k, preferred_element_type=jnp.float32)

    @pl.when(k == nk - 1)
    def _():
        # Self term from the resident bf16 xw1 (same row tile as the output).
        ioff = pl.multiple_of(i * tm, tm)
        xw1_i = xw1_ref[pl.ds(ioff, tm), :].astype(jnp.float32)
        # First Linear (fused with aggregation) + ReLU.
        h1 = (1.0 + eps_ref[0]) * xw1_i + o_ref[...] + b1_ref[...]
        h1 = jnp.maximum(h1, 0.0)
        # Second Linear + ReLU (small Cp x Cp matmul, f32).
        h2 = jnp.dot(h1, w2_ref[...], preferred_element_type=jnp.float32)
        h2 = jnp.maximum(h2 + b2_ref[...], 0.0)
        # + bias, final ReLU.
        o_ref[...] = jnp.maximum(h2 + bias_ref[...], 0.0)


def _pick_row_tile(n):
    # Large tiles (fewer grid steps; kernel is HBM-bound, not MXU-bound) but
    # prefer >=2 row tiles so the "parallel" axis can feed both v7x TensorCores.
    prefer = (512, 256, 128, 64, 32)
    for c in prefer:
        if c <= n // 2 and n % c == 0:
            return c
    for c in prefer + (16, 8):
        if c <= n and n % c == 0:
            return c
    return n


def _pick_col_tile(n, tm, cp, adj_itemsize):
    # Fixed VMEM footprint (resident xw1, output tiles, weights) + the
    # double-buffered adj tiles must stay under the budget.
    fixed = (2 * n * cp * 2            # resident xw1 bf16 (counted double-buffered)
             + 2 * tm * cp * 4         # output tiles (f32, double-buffered)
             + 2 * (cp * cp + 3 * cp) * 4)   # W2 / b1 / b2 / bias
    cands = (8192, 4096, 2048, 1024, 512, 256, 128)
    feasible = [c for c in cands if c <= n and n % c == 0]
    for c in feasible:
        if fixed + 2 * tm * c * adj_itemsize <= _VMEM_FOOTPRINT_BUDGET:
            return c
    if feasible:
        return feasible[-1]
    return n


def _pad_cols(a, cp):
    pad = cp - a.shape[-1]
    if pad == 0:
        return a
    return jnp.pad(a, [(0, 0)] * (a.ndim - 1) + [(0, pad)])


def dense_gin_conv(x, adj, eps, w1, b1, w2, b2, bias, *, tm=None, tk=None):
    """out = relu(mlp((1+eps)*x + adj@x) + bias).

    adj should be 0/1; pass it in a narrow dtype (int8 recommended) — it is
    streamed as-is and upcast to bf16 inside the kernel.
    """
    N, Cin = x.shape
    Cout = w1.shape[1]
    Cp = -(-Cout // 128) * 128  # lane-dense padded channel dim

    b1 = jnp.reshape(b1, (1, -1))
    b2 = jnp.reshape(b2, (1, -1))
    bias = jnp.reshape(bias, (1, -1))

    # Zero-pad channel dims (pad columns stay exactly zero through both ReLUs).
    w1p = _pad_cols(w1.astype(jnp.float32), Cp)
    b1p = _pad_cols(b1.astype(jnp.float32), Cp)
    b2p = _pad_cols(b2.astype(jnp.float32), Cp)
    biasp = _pad_cols(bias.astype(jnp.float32), Cp)
    w2p = jnp.pad(w2.astype(jnp.float32),
                  ((0, Cp - Cout), (0, Cp - Cout)))

    # Tiny prep matmul (aggregation commutes with the first Linear).
    xw1 = jnp.dot(x.astype(jnp.float32), w1p,
                  preferred_element_type=jnp.float32)          # [N, Cp] f32
    xw1_bf16 = xw1.astype(jnp.bfloat16)                        # resident in VMEM

    adj_itemsize = adj.dtype.itemsize
    tm = tm or _pick_row_tile(N)
    tk = tk or _pick_col_tile(N, tm, Cp, adj_itemsize)
    assert N % tm == 0 and N % tk == 0

    grid = (N // tm, N // tk)

    vmem_need = (2 * tm * tk * adj_itemsize          # adj tiles (double-buffered)
                 + 2 * N * Cp * 2                    # resident xw1 bf16
                 + 2 * tm * Cp * 4                   # output tiles
                 + 2 * (Cp * Cp + 3 * Cp) * 4)       # weights / biases
    vmem_limit = int(min(max(int(1.5 * vmem_need), 32 * 2**20), 60 * 2**20))

    out_p = pl.pallas_call(
        _gin_kernel,
        out_shape=jax.ShapeDtypeStruct((N, Cp), jnp.float32),
        grid_spec=pltpu.PrefetchScalarGridSpec(
            num_scalar_prefetch=0,
            grid=grid,
            in_specs=[
                # eps: tiny scalar, SMEM.
                pl.BlockSpec(memory_space=pltpu.MemorySpace.SMEM),
                # adj: (row, col) tile, streamed in its native (narrow) dtype.
                pl.BlockSpec((tm, tk), lambda i, k: (i, k)),
                # xw1 (bf16): whole array VMEM-resident, sliced in-kernel.
                pl.BlockSpec((N, Cp), lambda i, k: (0, 0)),
                # W2 / b1 / b2 / bias: full, constant index.
                pl.BlockSpec((Cp, Cp), lambda i, k: (0, 0)),
                pl.BlockSpec((1, Cp), lambda i, k: (0, 0)),
                pl.BlockSpec((1, Cp), lambda i, k: (0, 0)),
                pl.BlockSpec((1, Cp), lambda i, k: (0, 0)),
            ],
            out_specs=pl.BlockSpec((tm, Cp), lambda i, k: (i, 0)),
        ),
        compiler_params=pltpu.CompilerParams(
            dimension_semantics=("parallel", "arbitrary"),
            vmem_limit_bytes=vmem_limit),
    )(eps, adj, xw1_bf16, w2p, b1p, b2p, biasp)

    return out_p[:, :Cout] if Cp != Cout else out_p


def reference_f32(x, adj, eps, w1, b1, w2, b2, bias):
    h = (1.0 + eps[0]) * x + adj @ x
    h = jnp.maximum(h @ w1 + b1, 0.0)
    h = jnp.maximum(h @ w2 + b2, 0.0)
    return jnp.maximum(h + bias, 0.0)


def reference_matched(x, adj, eps, w1, b1, w2, b2, bias):
    # Same math / precision policy as the kernel (bf16 aggregation operands and
    # bf16 xw1 self-term, f32 accumulation) — tight check of the kernel logic.
    xw1 = jnp.dot(x, w1, preferred_element_type=jnp.float32)
    xw1_bf = xw1.astype(jnp.bfloat16)
    agg = jnp.dot(adj.astype(jnp.bfloat16), xw1_bf,
                  preferred_element_type=jnp.float32)
    h1 = jnp.maximum((1.0 + eps[0]) * xw1_bf.astype(jnp.float32) + agg + b1, 0.0)
    h2 = jnp.maximum(jnp.dot(h1, w2, preferred_element_type=jnp.float32) + b2,
                     0.0)
    return jnp.maximum(h2 + bias, 0.0)


if __name__ == "__main__":
    N, Cin, Cout = 128, 32, 64

    key = jax.random.PRNGKey(0)
    kx, ka, kw1, kb1, kw2, kb2 = jax.random.split(key, 6)

    x = jax.random.normal(kx, (N, Cin), dtype=jnp.float32)
    # Dense 0/1 adjacency stored narrow (int8) — exact, streamed as-is into the
    # kernel (stand-in for the sparse adj in torch.sparse.mm).
    adj = (jax.random.uniform(ka, (N, N)) < 0.1).astype(jnp.int8)

    # Linear params: deterministic uniform init (PyTorch-style scale).
    lim1 = 1.0 / jnp.sqrt(Cin)
    lim2 = 1.0 / jnp.sqrt(Cout)
    w1 = jax.random.uniform(kw1, (Cin, Cout), minval=-lim1, maxval=lim1,
                            dtype=jnp.float32)
    b1 = jax.random.uniform(kb1, (1, Cout), minval=-lim1, maxval=lim1,
                            dtype=jnp.float32)
    w2 = jax.random.uniform(kw2, (Cout, Cout), minval=-lim2, maxval=lim2,
                            dtype=jnp.float32)
    b2 = jax.random.uniform(kb2, (1, Cout), minval=-lim2, maxval=lim2,
                            dtype=jnp.float32)
    # reset_parameters(): eps = 0, bias = 0
    eps = jnp.zeros((1,), dtype=jnp.float32)
    bias = jnp.zeros((1, Cout), dtype=jnp.float32)

    out = jax.block_until_ready(
        dense_gin_conv(x, adj, eps, w1, b1, w2, b2, bias))
    assert out.shape == (N, Cout)

    adj_f32 = adj.astype(jnp.float32)

    # Tight check against a reference with the same mixed-precision policy.
    ref_m = reference_matched(x, adj_f32, eps, w1, b1, w2, b2, bias)
    assert jnp.allclose(out, ref_m, atol=1e-4, rtol=1e-4)

    # Looser check against the pure-f32 PyTorch-semantics reference (only lossy
    # step is xw1 -> bf16; adj 0/1 is exact in int8/bf16).
    ref = reference_f32(x, adj_f32, eps, w1, b1, w2, b2, bias)
    assert jnp.allclose(out, ref, atol=2e-2, rtol=2e-2)

    print("KERNEL_OK")
</pallas_src>

<mosaic_0001>
module attributes {stable_mosaic.version = 11 : i64} {
  func.func @_gin_kernel(%arg0: i32, %arg1: i32, %arg2: memref<1xf32, #tpu.memory_space<smem>>, %arg3: memref<64x128xi8, #tpu.memory_space<vmem>>, %arg4: memref<128x128xbf16, #tpu.memory_space<vmem>>, %arg5: memref<128x128xf32, #tpu.memory_space<vmem>>, %arg6: memref<1x128xf32, #tpu.memory_space<vmem>>, %arg7: memref<1x128xf32, #tpu.memory_space<vmem>>, %arg8: memref<1x128xf32, #tpu.memory_space<vmem>>, %arg9: memref<64x128xf32, #tpu.memory_space<vmem>>) attributes {dimension_semantics = [#tpu.dimension_semantics<parallel>, #tpu.dimension_semantics<arbitrary>], iteration_bounds = array<i64: 2, 1>, scalar_prefetch = 0 : i64, scratch_operands = 0 : i64, tpu.core_type = #tpu.core_type<tc>, window_params = [{transform_indices = @transform_0, window_bounds = array<i64: 1>}, {transform_indices = @transform_1, window_bounds = array<i64: 64, 128>}, {pipeline_mode = #tpu.pipeline_mode<synchronous>, transform_indices = @transform_2, window_bounds = array<i64: 128, 128>}, {pipeline_mode = #tpu.pipeline_mode<synchronous>, transform_indices = @transform_3, window_bounds = array<i64: 128, 128>}, {pipeline_mode = #tpu.pipeline_mode<synchronous>, transform_indices = @transform_4, window_bounds = array<i64: 1, 128>}, {pipeline_mode = #tpu.pipeline_mode<synchronous>, transform_indices = @transform_5, window_bounds = array<i64: 1, 128>}, {pipeline_mode = #tpu.pipeline_mode<synchronous>, transform_indices = @transform_6, window_bounds = array<i64: 1, 128>}, {transform_indices = @transform_7, window_bounds = array<i64: 64, 128>}]} {
    %c0_i32 = arith.constant 0 : i32
    %0 = arith.cmpi eq, %arg1, %c0_i32 : i32
    %1 = arith.extui %0 : i1 to i32
    %c0_i32_0 = arith.constant 0 : i32
    %2 = arith.cmpi ne, %1, %c0_i32_0 : i32
    scf.if %2 {
      %cst_9 = arith.constant 0.000000e+00 : f32
      %16 = vector.broadcast %cst_9 : f32 to vector<64x128xf32>
      %c0_10 = arith.constant 0 : index
      %c0_11 = arith.constant 0 : index
      %17 = vector.load %arg9[%c0_10, %c0_11] : memref<64x128xf32, #tpu.memory_space<vmem>>, vector<64x128xf32>
      tpu.vector_store %arg9[%c0_10, %c0_11], %16 {strides = array<i32>} : memref<64x128xf32, #tpu.memory_space<vmem>>, vector<64x128xf32>,
    } else {
    }
    %c0 = arith.constant 0 : index
    %c0_1 = arith.constant 0 : index
    %3 = vector.load %arg3[%c0, %c0_1] : memref<64x128xi8, #tpu.memory_space<vmem>>, vector<64x128xi8>
    %4 = arith.sitofp %3 : vector<64x128xi8> to vector<64x128xbf16>
    %c128_i32 = arith.constant 128 : i32
    %5 = arith.muli %arg1, %c128_i32 : i32
    %6 = tpu.assume_multiple %5, 128 : i32
    %7 = arith.index_cast %6 : i32 to index
    %c0_2 = arith.constant 0 : index
    %8 = vector.load %arg4[%7, %c0_2] : memref<128x128xbf16, #tpu.memory_space<vmem>>, vector<128x128xbf16>
    %c0_3 = arith.constant 0 : index
    %c0_4 = arith.constant 0 : index
    %9 = vector.load %arg9[%c0_3, %c0_4] : memref<64x128xf32, #tpu.memory_space<vmem>>, vector<64x128xf32>
    %cst = arith.constant dense<0.000000e+00> : vector<64x128xf32>
    %10 = tpu.matmul %4, %8, %cst {dimension_numbers = #tpu.dot_dimension_numbers<[1], [0], [0], [1], [0, 0, 1, 1], [], []>} : vector<64x128xbf16>, vector<128x128xbf16>, vector<64x128xf32> -> vector<64x128xf32>
    %11 = arith.addf %9, %10 : vector<64x128xf32>
    %c0_5 = arith.constant 0 : index
    %c0_6 = arith.constant 0 : index
    %12 = vector.load %arg9[%c0_5, %c0_6] : memref<64x128xf32, #tpu.memory_space<vmem>>, vector<64x128xf32>
    tpu.vector_store %arg9[%c0_5, %c0_6], %11 {strides = array<i32>} : memref<64x128xf32, #tpu.memory_space<vmem>>, vector<64x128xf32>,
    %c0_i32_7 = arith.constant 0 : i32
    %13 = arith.cmpi eq, %arg1, %c0_i32_7 : i32
    %14 = arith.extui %13 : i1 to i32
    %c0_i32_8 = arith.constant 0 : i32
    %15 = arith.cmpi ne, %14, %c0_i32_8 : i32
    scf.if %15 {
      %c64_i32 = arith.constant 64 : i32
      %16 = arith.muli %arg0, %c64_i32 : i32
      %17 = tpu.assume_multiple %16, 64 : i32
      %18 = arith.index_cast %17 : i32 to index
      %c0_9 = arith.constant 0 : index
      %19 = vector.load %arg4[%18, %c0_9] : memref<128x128xbf16, #tpu.memory_space<vmem>>, vector<64x128xbf16>
      %20 = arith.extf %19 : vector<64x128xbf16> to vector<64x128xf32>
      %c0_10 = arith.constant 0 : index
      %21 = memref.load %arg2[%c0_10] : memref<1xf32, #tpu.memory_space<smem>>
      %cst_11 = arith.constant 1.000000e+00 : f32
      %22 = arith.addf %cst_11, %21 : f32
      %23 = vector.broadcast %22 : f32 to vector<64x128xf32>
      %24 = arith.mulf %23, %20 : vector<64x128xf32>
      %c0_12 = arith.constant 0 : index
      %c0_13 = arith.constant 0 : index
      %25 = vector.load %arg9[%c0_12, %c0_13] : memref<64x128xf32, #tpu.memory_space<vmem>>, vector<64x128xf32>
      %26 = arith.addf %24, %25 : vector<64x128xf32>
      %c0_14 = arith.constant 0 : index
      %c0_15 = arith.constant 0 : index
      %27 = vector.load %arg6[%c0_14, %c0_15] : memref<1x128xf32, #tpu.memory_space<vmem>>, vector<1x128xf32>
      %28 = vector.broadcast %27 : vector<1x128xf32> to vector<64x128xf32>
      %29 = arith.addf %26, %28 : vector<64x128xf32>
      %cst_16 = arith.constant 0.000000e+00 : f32
      %30 = vector.broadcast %cst_16 : f32 to vector<64x128xf32>
      %31 = arith.maximumf %29, %30 : vector<64x128xf32>
      %c0_17 = arith.constant 0 : index
      %c0_18 = arith.constant 0 : index
      %32 = vector.load %arg5[%c0_17, %c0_18] : memref<128x128xf32, #tpu.memory_space<vmem>>, vector<128x128xf32>
      %cst_19 = arith.constant dense<0.000000e+00> : vector<64x128xf32>
      %33 = tpu.matmul %31, %32, %cst_19 {dimension_numbers = #tpu.dot_dimension_numbers<[1], [0], [0], [1], [0, 0, 1, 1], [], []>} : vector<64x128xf32>, vector<128x128xf32>, vector<64x128xf32> -> vector<64x128xf32>
      %c0_20 = arith.constant 0 : index
      %c0_21 = arith.constant 0 : index
      %34 = vector.load %arg7[%c0_20, %c0_21] : memref<1x128xf32, #tpu.memory_space<vmem>>, vector<1x128xf32>
      %35 = vector.broadcast %34 : vector<1x128xf32> to vector<64x128xf32>
      %36 = arith.addf %33, %35 : vector<64x128xf32>
      %cst_22 = arith.constant 0.000000e+00 : f32
      %37 = vector.broadcast %cst_22 : f32 to vector<64x128xf32>
      %38 = arith.maximumf %36, %37 : vector<64x128xf32>
      %c0_23 = arith.constant 0 : index
      %c0_24 = arith.constant 0 : index
      %39 = vector.load %arg8[%c0_23, %c0_24] : memref<1x128xf32, #tpu.memory_space<vmem>>, vector<1x128xf32>
      %40 = vector.broadcast %39 : vector<1x128xf32> to vector<64x128xf32>
      %41 = arith.addf %38, %40 : vector<64x128xf32>
      %cst_25 = arith.constant 0.000000e+00 : f32
      %42 = vector.broadcast %cst_25 : f32 to vector<64x128xf32>
      %43 = arith.maximumf %41, %42 : vector<64x128xf32>
      %c0_26 = arith.constant 0 : index
      %c0_27 = arith.constant 0 : index
      %44 = vector.load %arg9[%c0_26, %c0_27] : memref<64x128xf32, #tpu.memory_space<vmem>>, vector<64x128xf32>
      tpu.vector_store %arg9[%c0_26, %c0_27], %43 {strides = array<i32>} : memref<64x128xf32, #tpu.memory_space<vmem>>, vector<64x128xf32>,
    } else {
    }
    return
  }
  func.func @transform_0(%arg0: i32, %arg1: i32) -> i32 {
    %c0_i32 = arith.constant 0 : i32
    %c0_i32_0 = arith.constant 0 : i32
    return %c0_i32 : i32
  }
  func.func @transform_1(%arg0: i32, %arg1: i32) -> (i32, i32) {
    %c0_i32 = arith.constant 0 : i32
    return %arg0, %arg1 : i32, i32
  }
  func.func @transform_2(%arg0: i32, %arg1: i32) -> (i32, i32) {
    %c0_i32 = arith.constant 0 : i32
    %c0_i32_0 = arith.constant 0 : i32
    %c0_i32_1 = arith.constant 0 : i32
    return %c0_i32, %c0_i32_0 : i32, i32
  }
  func.func @transform_3(%arg0: i32, %arg1: i32) -> (i32, i32) {
    %c0_i32 = arith.constant 0 : i32
    %c0_i32_0 = arith.constant 0 : i32
    %c0_i32_1 = arith.constant 0 : i32
    return %c0_i32, %c0_i32_0 : i32, i32
  }
  func.func @transform_4(%arg0: i32, %arg1: i32) -> (i32, i32) {
    %c0_i32 = arith.constant 0 : i32
    %c0_i32_0 = arith.constant 0 : i32
    %c0_i32_1 = arith.constant 0 : i32
    return %c0_i32, %c0_i32_0 : i32, i32
  }
  func.func @transform_5(%arg0: i32, %arg1: i32) -> (i32, i32) {
    %c0_i32 = arith.constant 0 : i32
    %c0_i32_0 = arith.constant 0 : i32
    %c0_i32_1 = arith.constant 0 : i32
    return %c0_i32, %c0_i32_0 : i32, i32
  }
  func.func @transform_6(%arg0: i32, %arg1: i32) -> (i32, i32) {
    %c0_i32 = arith.constant 0 : i32
    %c0_i32_0 = arith.constant 0 : i32
    %c0_i32_1 = arith.constant 0 : i32
    return %c0_i32, %c0_i32_0 : i32, i32
  }
  func.func @transform_7(%arg0: i32, %arg1: i32) -> (i32, i32) {
    %c0_i32 = arith.constant 0 : i32
    %c0_i32_0 = arith.constant 0 : i32
    return %arg0, %c0_i32 : i32, i32
  }
}

</mosaic_0001>

<llo_original>
// kernel: tpu_custom_call.1
$region0: #{tpu_custom_call.1}
  #allocation0 [shape = 'u32[]', space=smem, size = 0x4, offset = 0x4, fixed_abs, tag = 'smem constant byte address 0x4 - core index']
  #allocation1 [shape = 'u32[144,128]{1,0:T(1,128)}', space=vmem, size = 0x12000, scoped, tag = 'internal scratch']
  #allocation2 [shape = 'f32[1]{0:T(128)S(6)}', space=smem, size = 0x200, scoped, tag = 'scoped memory for tpu_custom_call.1']
  %s0 = inlined_call_operand.<no memory space> [shape: f32[1], index: 0, kind: input, shape index: {}]
  %s1 = inlined_call_operand.hbm [shape: s8[128,128], index: 1, kind: input, shape index: {}]
  %s2 = inlined_call_operand.hbm [shape: bf16[128,128], index: 2, kind: input, shape index: {}]
  %s3 = inlined_call_operand.hbm [shape: f32[128,128], index: 3, kind: input, shape index: {}]
  %s4 = inlined_call_operand.vmem [shape: f32[1,128], index: 4, kind: input, shape index: {}]
  %s5 = inlined_call_operand.vmem [shape: f32[1,128], index: 5, kind: input, shape index: {}]
  %s6 = inlined_call_operand.vmem [shape: f32[1,128], index: 6, kind: input, shape index: {}]
  %s7 = inlined_call_operand.hbm [shape: f32[128,128], index: 7, kind: output, shape index: {}]
  %s8 = sld [smem:[#allocation0]]
  $region81: #{tpu_custom_call.1} parent=0
    _
  %s10 = ssub.s32 1, %s8
  %s11 = scalar_select 0, %s10, %s8
  %12 = sst [smem:[#allocation2]] %s0
  $region1: #{tpu_custom_call.1} parent=0
    #allocation3 [shape = 'u8[16384]{0}', space=vmem, size = 0x4000, scoped, tag = 'input window, operand 1']
    #allocation4 [shape = 's32[2]{0}', space=sflag, size = 0x8, scoped, tag = 'scoped memory for tpu_custom_call.1']
    #allocation5 [shape = 's32[2]{0}', space=sflag, size = 0x8, scoped, tag = 'scoped memory for tpu_custom_call.1']
    #allocation6 [shape = 'u8[32768]{0}', space=vmem, size = 0x8000, scoped, tag = 'input window, operand 2, single buffered']
    #allocation7 [shape = 's32[1]{0}', space=sflag, size = 0x4, scoped, tag = 'scoped memory for tpu_custom_call.1']
    #allocation8 [shape = 'u8[65536]{0}', space=vmem, size = 0x10000, scoped, tag = 'input window, operand 3, single buffered']
    #allocation9 [shape = 'u8[65536]{0}', space=vmem, size = 0x10000, scoped, tag = 'output window, operand 0']
    %13 = vsyncpa [#allocation4], 0
    %s14 = scalar_lea.sflag [#allocation4], 1
    %15 = vsyncpa %s14, 0
    %16 = vsyncpa [#allocation7], 0
    %17 = vsyncpa [#allocation5], 0
    %s18 = scalar_lea.sflag [#allocation5], 1
    %19 = vsyncpa %s18, 0
    loop: start=0, step=1, limit=4
    $region2: #{tpu_custom_call.1} parent=1 // loop_pre_header
      _
    $region3: #{tpu_custom_call.1} parent=1 // loop_header
      %s21 = sphi 0, %s25
      %p22 = scmp.ge.s32.totalorder %s21, 4
      %s28 = sphi 0, %s40
      %s29 = sphi 0, %s36
      %s30 = sphi 0, %s28
      %s31 = sphi 0, %s29
      %s32 = sphi 0, %s30
      %s33 = sphi 0, %s31
      %s41 = sphi 0, %s41
      %s43 = sphi 0, %s41
      %s44 = sphi 0, %s43
      %s58 = sphi 0, %s44
      %s66 = sphi 0, %s68
      %s69 = sphi 0, %s66
      %s70 = sphi 0, %s69
      %s86 = sphi 0, %s70
      %s90 = sphi 0, %s90
      %s92 = sphi 0, %s90
      %s93 = sphi 0, %s92
      %s107 = sphi 0, %s93
      %s111 = sphi 0, %s111
      %s113 = sphi 0, %s111
      %s114 = sphi 0, %s113
      %s128 = sphi 0, %s114
      %s132 = sphi 0, %s132
      %s134 = sphi 0, %s132
      %s135 = sphi 0, %s134
      %s149 = sphi 0, %s135
      %s153 = sphi 0, %s153
      %s155 = sphi 0, %s153
      %s156 = sphi 0, %s155
      %s170 = sphi 0, %s156
      %s174 = sphi 0, %s174
      %s176 = sphi 0, %s174
      %s177 = sphi 0, %s176
      %s191 = sphi 0, %s177
      %s197 = sphi 0, %s199
      %s200 = sphi 0, %s197
      %s201 = sphi 0, %s200
      %s217 = sphi 0, %s201
    $region4: #{tpu_custom_call.1} parent=1 // loop_header_branch
      %24 = sbr.rel (%p22) target = $region8
    $region5: #{tpu_custom_call.1} parent=1 // loop_body
      %s26 = ssub.s32 %s21, 1
      %s27 = ssub.s32 %s21, 2
      %s34 = sadd.s32 1, %s29
      %p35 = scmp.ge.s32.totalorder %s34, 1
      %s36 = scalar_select %p35, 0, %s34
      %s37 = sadd.s32 1, %s28
      %s38 = scalar_select %p35, %s37, %s28
      %p39 = scmp.ge.s32.totalorder %s38, 2
      %s40 = scalar_select %p39, 0, %s38
      %s42 = sadd.s32 %s41, 1
      %p45 = scmp.eq.s32.totalorder %s21, 1
      %p46 = scmp.ne.s32.totalorder %s41, %s43
      %p47 = scmp.eq.s32.totalorder %s21, 0
      %p48 = por %p46, %p47
      %p49 = scmp.ne.s32.totalorder %s41, %s43
      %p50 = scmp.eq.s32.totalorder %s26, 1
      %p51 = por %p49, %p50
      %p52 = scmp.ne.s32.totalorder %s43, %s44
      %p53 = scmp.eq.s32.totalorder %s26, 0
      %p54 = por %p52, %p53
      %p55 = scmp.ne.s32.totalorder %s43, %s44
      %p56 = scmp.eq.s32.totalorder %s27, 1
      %p57 = por %p55, %p56
      %p59 = scmp.ne.s32.totalorder %s44, %s58
      %p60 = scmp.eq.s32.totalorder %s27, 0
      %p61 = por %p59, %p60
      %s62 = ssub.s32 %s28, %s40
      %s63 = ssub.s32 %s29, %s36
      %s64 = sor.u32 %s62, %s63
      %p65 = scmp.eq.s32.totalorder %s64, 0
      %s67 = sadd.s32 %s66, 1
      %s68 = scalar_select %p65, %s66, %s67
      %p71 = pneg %p65
      %p72 = scmp.eq.s32.totalorder %s21, 1
      %p73 = por %p71, %p72
      %p74 = scmp.ne.s32.totalorder %s66, %s69
      %p75 = scmp.eq.s32.totalorder %s21, 0
      %p76 = por %p74, %p75
      %p77 = scmp.ne.s32.totalorder %s66, %s69
      %p78 = scmp.eq.s32.totalorder %s26, 1
      %p79 = por %p77, %p78
      %p80 = scmp.ne.s32.totalorder %s69, %s70
      %p81 = scmp.eq.s32.totalorder %s26, 0
      %p82 = por %p80, %p81
      %p83 = scmp.ne.s32.totalorder %s69, %s70
      %p84 = scmp.eq.s32.totalorder %s27, 1
      %p85 = por %p83, %p84
      %p87 = scmp.ne.s32.totalorder %s70, %s86
      %p88 = scmp.eq.s32.totalorder %s27, 0
      %p89 = por %p87, %p88
      %s91 = sadd.s32 %s90, 1
      %p94 = scmp.eq.s32.totalorder %s21, 1
      %p95 = scmp.ne.s32.totalorder %s90, %s92
      %p96 = scmp.eq.s32.totalorder %s21, 0
      %p97 = por %p95, %p96
      %p98 = scmp.ne.s32.totalorder %s90, %s92
      %p99 = scmp.eq.s32.totalorder %s26, 1
      %p100 = por %p98, %p99
      %p101 = scmp.ne.s32.totalorder %s92, %s93
      %p102 = scmp.eq.s32.totalorder %s26, 0
      %p103 = por %p101, %p102
      %p104 = scmp.ne.s32.totalorder %s92, %s93
      %p105 = scmp.eq.s32.totalorder %s27, 1
      %p106 = por %p104, %p105
      %p108 = scmp.ne.s32.totalorder %s93, %s107
      %p109 = scmp.eq.s32.totalorder %s27, 0
      %p110 = por %p108, %p109
      %s112 = sadd.s32 %s111, 1
      %p115 = scmp.eq.s32.totalorder %s21, 1
      %p116 = scmp.ne.s32.totalorder %s111, %s113
      %p117 = scmp.eq.s32.totalorder %s21, 0
      %p118 = por %p116, %p117
      %p119 = scmp.ne.s32.totalorder %s111, %s113
      %p120 = scmp.eq.s32.totalorder %s26, 1
      %p121 = por %p119, %p120
      %p122 = scmp.ne.s32.totalorder %s113, %s114
      %p123 = scmp.eq.s32.totalorder %s26, 0
      %p124 = por %p122, %p123
      %p125 = scmp.ne.s32.totalorder %s113, %s114
      %p126 = scmp.eq.s32.totalorder %s27, 1
      %p127 = por %p125, %p126
      %p129 = scmp.ne.s32.totalorder %s114, %s128
      %p130 = scmp.eq.s32.totalorder %s27, 0
      %p131 = por %p129, %p130
      %s133 = sadd.s32 %s132, 1
      %p136 = scmp.eq.s32.totalorder %s21, 1
      %p137 = scmp.ne.s32.totalorder %s132, %s134
      %p138 = scmp.eq.s32.totalorder %s21, 0
      %p139 = por %p137, %p138
      %p140 = scmp.ne.s32.totalorder %s132, %s134
      %p141 = scmp.eq.s32.totalorder %s26, 1
      %p142 = por %p140, %p141
      %p143 = scmp.ne.s32.totalorder %s134, %s135
      %p144 = scmp.eq.s32.totalorder %s26, 0
      %p145 = por %p143, %p144
      %p146 = scmp.ne.s32.totalorder %s134, %s135
      %p147 = scmp.eq.s32.totalorder %s27, 1
      %p148 = por %p146, %p147
      %p150 = scmp.ne.s32.totalorder %s135, %s149
      %p151 = scmp.eq.s32.totalorder %s27, 0
      %p152 = por %p150, %p151
      %s154 = sadd.s32 %s153, 1
      %p157 = scmp.eq.s32.totalorder %s21, 1
      %p158 = scmp.ne.s32.totalorder %s153, %s155
      %p159 = scmp.eq.s32.totalorder %s21, 0
      %p160 = por %p158, %p159
      %p161 = scmp.ne.s32.totalorder %s153, %s155
      %p162 = scmp.eq.s32.totalorder %s26, 1
      %p163 = por %p161, %p162
      %p164 = scmp.ne.s32.totalorder %s155, %s156
      %p165 = scmp.eq.s32.totalorder %s26, 0
      %p166 = por %p164, %p165
      %p167 = scmp.ne.s32.totalorder %s155, %s156
      %p168 = scmp.eq.s32.totalorder %s27, 1
      %p169 = por %p167, %p168
      %p171 = scmp.ne.s32.totalorder %s156, %s170
      %p172 = scmp.eq.s32.totalorder %s27, 0
      %p173 = por %p171, %p172
      %s175 = sadd.s32 %s174, 1
      %p178 = scmp.eq.s32.totalorder %s21, 1
      %p179 = scmp.ne.s32.totalorder %s174, %s176
      %p180 = scmp.eq.s32.totalorder %s21, 0
      %p181 = por %p179, %p180
      %p182 = scmp.ne.s32.totalorder %s174, %s176
      %p183 = scmp.eq.s32.totalorder %s26, 1
      %p184 = por %p182, %p183
      %p185 = scmp.ne.s32.totalorder %s176, %s177
      %p186 = scmp.eq.s32.totalorder %s26, 0
      %p187 = por %p185, %p186
      %p188 = scmp.ne.s32.totalorder %s176, %s177
      %p189 = scmp.eq.s32.totalorder %s27, 1
      %p190 = por %p188, %p189
      %p192 = scmp.ne.s32.totalorder %s177, %s191
      %p193 = scmp.eq.s32.totalorder %s27, 0
      %p194 = por %p192, %p193
      %s195 = ssub.s32 %s28, %s40
      %p196 = scmp.eq.s32.totalorder %s195, 0
      %s198 = sadd.s32 %s197, 1
      %s199 = scalar_select %p196, %s197, %s198
      %p202 = pneg %p196
      %p203 = scmp.eq.s32.totalorder %s21, 1
      %p204 = por %p202, %p203
      %p205 = scmp.ne.s32.totalorder %s197, %s200
      %p206 = scmp.eq.s32.totalorder %s21, 0
      %p207 = por %p205, %p206
      %p208 = scmp.ne.s32.totalorder %s197, %s200
      %p209 = scmp.eq.s32.totalorder %s26, 1
      %p210 = por %p208, %p209
      %p211 = scmp.ne.s32.totalorder %s200, %s201
      %p212 = scmp.eq.s32.totalorder %s26, 0
      %p213 = por %p211, %p212
      %p214 = scmp.ne.s32.totalorder %s200, %s201
      %p215 = scmp.eq.s32.totalorder %s27, 1
      %p216 = por %p214, %p215
      %p218 = scmp.ne.s32.totalorder %s201, %s217
      %p219 = scmp.eq.s32.totalorder %s27, 0
      %p220 = por %p218, %p219
      %p221 = scmp.le.s32.totalorder 1, %s21
      %p222 = scmp.lt.s32.totalorder %s21, 3
      %p223 = pnand %p221, %p222
      %p224 = pneg %p223
      // Predicated region
      $region9: #{tpu_custom_call.1} parent=5 // pred_check
        _
      $region10: #{tpu_custom_call.1} parent=5 // pred_check_branch
        %226 = sbr.rel (%p223) target = $region12
      $region11: #{tpu_custom_call.1} parent=5 // pred_region
        %s227 = ssub.s32 %s21, 1
        // Predicated region
        $region13: #{tpu_custom_call.1} parent=11 // pred_check
          %p228 = pneg %p54
        $region14: #{tpu_custom_call.1} parent=11 // pred_check_branch
          %230 = sbr.rel (%p228) target = $region16
        $region15: #{tpu_custom_call.1} parent=11 // pred_region
          _
        $region16: #{tpu_custom_call.1} parent=11 // pred_fallthru
          _
        // Predicated region
        $region17: #{tpu_custom_call.1} parent=11 // pred_check
          %p231 = pneg %p103
        $region18: #{tpu_custom_call.1} parent=11 // pred_check_branch
          %233 = sbr.rel (%p231) target = $region20
        $region19: #{tpu_custom_call.1} parent=11 // pred_region
          %s235 = ssub.s32 1024, 1024
          %236 = vsyncadd [#allocation7], %s235
          %s237 = sshll.u32 [#allocation6], 4
          %s238 = int_to_ptr.vmem [resolvable:$true] %s237
          %243 = dma.hbm_to_vmem [thread:$0]  %s2, 1024, %s238, [#allocation7], 64, 64, 4
        $region20: #{tpu_custom_call.1} parent=11 // pred_fallthru
          _
        // Predicated region
        $region21: #{tpu_custom_call.1} parent=11 // pred_check
          %p244 = pneg %p124
        $region22: #{tpu_custom_call.1} parent=11 // pred_check_branch
          %246 = sbr.rel (%p244) target = $region24
        $region23: #{tpu_custom_call.1} parent=11 // pred_region
          %s248 = ssub.s32 2048, 2048
          %249 = vsyncadd [#allocation7], %s248
          %s250 = sshll.u32 [#allocation8], 4
          %s251 = int_to_ptr.vmem [resolvable:$true] %s250
          %256 = dma.hbm_to_vmem [thread:$0]  %s3, 2048, %s251, [#allocation7], 128, 128, 8
        $region24: #{tpu_custom_call.1} parent=11 // pred_fallthru
          _
        // Predicated region
        $region25: #{tpu_custom_call.1} parent=11 // pred_check
          %p257 = pneg %p145
        $region26: #{tpu_custom_call.1} parent=11 // pred_check_branch
          %259 = sbr.rel (%p257) target = $region28
        $region27: #{tpu_custom_call.1} parent=11 // pred_region
          _
        $region28: #{tpu_custom_call.1} parent=11 // pred_fallthru
          _
        // Predicated region
        $region29: #{tpu_custom_call.1} parent=11 // pred_check
          %p260 = pneg %p166
        $region30: #{tpu_custom_call.1} parent=11 // pred_check_branch
          %262 = sbr.rel (%p260) target = $region32
        $region31: #{tpu_custom_call.1} parent=11 // pred_region
          _
        $region32: #{tpu_custom_call.1} parent=11 // pred_fallthru
          _
        // Predicated region
        $region33: #{tpu_custom_call.1} parent=11 // pred_check
          %p263 = pneg %p187
        $region34: #{tpu_custom_call.1} parent=11 // pred_check_branch
          %265 = sbr.rel (%p263) target = $region36
        $region35: #{tpu_custom_call.1} parent=11 // pred_region
          _
        $region36: #{tpu_custom_call.1} parent=11 // pred_fallthru
          _
      $region12: #{tpu_custom_call.1} parent=5 // pred_fallthru
        _
      %p266 = scmp.lt.s32.totalorder %s21, 2
      // Predicated region
      $region37: #{tpu_custom_call.1} parent=5 // pred_check
        %p267 = pneg %p266
      $region38: #{tpu_custom_call.1} parent=5 // pred_check_branch
        %269 = sbr.rel (%p267) target = $region40
      $region39: #{tpu_custom_call.1} parent=5 // pred_region
        // Predicated region
        $region41: #{tpu_custom_call.1} parent=39 // pred_check
          %p270 = pneg %p76
        $region42: #{tpu_custom_call.1} parent=39 // pred_check_branch
          %272 = sbr.rel (%p270) target = $region44
        $region43: #{tpu_custom_call.1} parent=39 // pred_region
          %s273 = sand.u32 %s66, 1
          %s274 = scalar_lea.sflag [#allocation4], %s273
          %s275 = sand.u32 %s66, 1
          %s276 = smul.addr %s275, 16
          %s277 = scalar_lea.vmem [#allocation3], %s276
          %s278 = smul.u32 2, %s28
          %s280 = ssub.s32 256, 256
          %281 = vsyncadd %s274, %s280
          %s282 = sadd.s32 %s29, %s278
          %s283 = smul.addr %s282, 128
          %s284 = scalar_lea.hbm %s1, %s283
          %s285 = sshll.u32 %s277, 4
          %s286 = int_to_ptr.vmem [resolvable:$true] %s285
          %291 = dma.hbm_to_vmem [thread:$0]  %s284, 256, %s286, %s274, 128, 128, 8
        $region44: #{tpu_custom_call.1} parent=39 // pred_fallthru
          _
      $region40: #{tpu_custom_call.1} parent=5 // pred_fallthru
        _
      %p292 = scmp.le.s32.totalorder 1, %s21
      %p293 = scmp.lt.s32.totalorder %s21, 3
      %p294 = pnand %p292, %p293
      %p295 = pneg %p294
      // Predicated region
      $region45: #{tpu_custom_call.1} parent=5 // pred_check
        _
      $region46: #{tpu_custom_call.1} parent=5 // pred_check_branch
        %297 = sbr.rel (%p294) target = $region48
      $region47: #{tpu_custom_call.1} parent=5 // pred_region
        %s298 = ssub.s32 %s21, 1
        %s299 = sand.u32 %s69, 1
        %s300 = scalar_lea.sflag [#allocation4], %s299
        %s301 = sand.u32 %s69, 1
        %s302 = smul.addr %s301, 16
        %s303 = scalar_lea.vmem [#allocation3], %s302
        // Predicated region
        $region49: #{tpu_custom_call.1} parent=47 // pred_check
          %p304 = pneg %p82
        $region50: #{tpu_custom_call.1} parent=47 // pred_check_branch
          %306 = sbr.rel (%p304) target = $region52
        $region51: #{tpu_custom_call.1} parent=47 // pred_region
          %307 = dma.done %s300, 256
        $region52: #{tpu_custom_call.1} parent=47 // pred_fallthru
          _
        // Predicated region
        $region53: #{tpu_custom_call.1} parent=47 // pred_check
          %p308 = pneg %p103
        $region54: #{tpu_custom_call.1} parent=47 // pred_check_branch
          %310 = sbr.rel (%p308) target = $region56
        $region55: #{tpu_custom_call.1} parent=47 // pred_region
          %311 = dma.done [#allocation7], 1024
        $region56: #{tpu_custom_call.1} parent=47 // pred_fallthru
          _
        // Predicated region
        $region57: #{tpu_custom_call.1} parent=47 // pred_check
          %p312 = pneg %p124
        $region58: #{tpu_custom_call.1} parent=47 // pred_check_branch
          %314 = sbr.rel (%p312) target = $region60
        $region59: #{tpu_custom_call.1} parent=47 // pred_region
          %315 = dma.done [#allocation7], 2048
        $region60: #{tpu_custom_call.1} parent=47 // pred_fallthru
          _
        %p316 = pneg %p54
        %p317 = pneg %p51
        %s318 = sand.u32 %s69, 1
        %s319 = scalar_lea.sflag [#allocation4], %s318
        %s320 = sand.u32 %s69, 1
        %s321 = smul.addr %s320, 16
        %s322 = scalar_lea.vmem [#allocation3], %s321
        %p323 = pneg %p82
        %p324 = pneg %p79
        %p325 = pneg %p103
        %p326 = pneg %p100
        %p327 = pneg %p124
        %p328 = pneg %p121
        %p329 = pneg %p145
        %p330 = pneg %p142
        %p331 = pneg %p166
        %p332 = pneg %p163
        %p333 = pneg %p187
        %p334 = pneg %p184
        %p335 = pneg %p213
        %p336 = pneg %p210
        %s337 = sand.u32 %s200, 1
        %s338 = scalar_lea.sflag [#allocation5], %s337
        %s339 = sand.u32 %s200, 1
        %s340 = smul.addr %s339, 64
        %s341 = scalar_lea.vmem [#allocation9], %s340
        %s342 = smul.u32 2, %s30
        %s343 = smul.u32 8, %s30
        %p345 = scmp.eq.s32.totalorder %s31, 0
        // Predicated region
        $region61: #{tpu_custom_call.1} parent=47 // pred_check
          %p346 = pneg %p345
        $region62: #{tpu_custom_call.1} parent=47 // pred_check_branch
          %348 = sbr.rel (%p346) target = $region64
        $region63: #{tpu_custom_call.1} parent=47 // pred_region
          %349 = vst [vmem:[%s341] sm:$0xff] 0.0
          %350 = vst [vmem:[%s341 + $0x8] sm:$0xff] 0.0
          %351 = vst [vmem:[%s341 + $0x10] sm:$0xff] 0.0
          %352 = vst [vmem:[%s341 + $0x18] sm:$0xff] 0.0
          %353 = vst [vmem:[%s341 + $0x20] sm:$0xff] 0.0
          %354 = vst [vmem:[%s341 + $0x28] sm:$0xff] 0.0
          %355 = vst [vmem:[%s341 + $0x30] sm:$0xff] 0.0
          %356 = vst [vmem:[%s341 + $0x38] sm:$0xff] 0.0
        $region64: #{tpu_custom_call.1} parent=47 // pred_fallthru
          _
        %v357 = vld [vmem:[%s303] sm:$0xff]
        %v358 = vld [vmem:[%s303 + $0x8] sm:$0xff]
        %v359 = vunpack.c.l.s8.bf16 %v357
        %v360 = vunpack.c.h.s8.bf16 %v357
        %v361 = vunpack.c.l.s8.bf16 %v358
        %v362 = vunpack.c.h.s8.bf16 %v358
        %s363 = smul.u32 %s31, 128
        %s364 = sshra.s32 %s363, 3
        %s365 = sand.u32 %s363, 7
        %s366 = smul.addr %s364, 4
        %s367 = scalar_lea.vmem [#allocation6], %s366
        %v368 = vld [vmem:[%s367] sm:$0xf]
        %v369 = vld [vmem:[%s367 + $0x4] sm:$0xf]
        %v370 = vld [vmem:[%s367 + $0x8] sm:$0xf]
        %v371 = vld [vmem:[%s367 + $0xc] sm:$0xf]
        %v372 = vld [vmem:[%s367 + $0x10] sm:$0xf]
        %v373 = vld [vmem:[%s367 + $0x14] sm:$0xf]
        %v374 = vld [vmem:[%s367 + $0x18] sm:$0xf]
        %v375 = vld [vmem:[%s367 + $0x1c] sm:$0xf]
        %v376 = vld [vmem:[%s367 + $0x20] sm:$0xf]
        %v377 = vld [vmem:[%s367 + $0x24] sm:$0xf]
        %v378 = vld [vmem:[%s367 + $0x28] sm:$0xf]
        %v379 = vld [vmem:[%s367 + $0x2c] sm:$0xf]
        %v380 = vld [vmem:[%s367 + $0x30] sm:$0xf]
        %v381 = vld [vmem:[%s367 + $0x34] sm:$0xf]
        %v382 = vld [vmem:[%s367 + $0x38] sm:$0xf]
        %v383 = vld [vmem:[%s367 + $0x3c] sm:$0xf]
        %v384 = vld [vmem:[%s341] sm:$0xff]
        %v385 = vld [vmem:[%s341 + $0x8] sm:$0xff]
        %v386 = vld [vmem:[%s341 + $0x10] sm:$0xff]
        %v387 = vld [vmem:[%s341 + $0x18] sm:$0xff]
        %v388 = vld [vmem:[%s341 + $0x20] sm:$0xff]
        %v389 = vld [vmem:[%s341 + $0x28] sm:$0xff]
        %v390 = vld [vmem:[%s341 + $0x30] sm:$0xff]
        %v391 = vld [vmem:[%s341 + $0x38] sm:$0xff]
        %v408 = vunpack.c.l.b16 %v368
        %v409 = vunpack.c.l.b16 %v369
        %v410 = vunpack.c.l.b16 %v370
        %v411 = vunpack.c.l.b16 %v371
        %v412 = vunpack.c.l.b16 %v372
        %v413 = vunpack.c.l.b16 %v373
        %v414 = vunpack.c.l.b16 %v374
        %v415 = vunpack.c.l.b16 %v375
        %v416 = vunpack.c.l.b16 %v376
        %v417 = vunpack.c.l.b16 %v377
        %v418 = vunpack.c.l.b16 %v378
        %v419 = vunpack.c.l.b16 %v379
        %v420 = vunpack.c.l.b16 %v380
        %v421 = vunpack.c.l.b16 %v381
        %v422 = vunpack.c.l.b16 %v382
        %v423 = vunpack.c.l.b16 %v383
        %v424 = vpack.c.b16 %v409, %v408
        %v425 = vpack.c.b16 %v411, %v410
        %v426 = vpack.c.b16 %v413, %v412
        %v427 = vpack.c.b16 %v415, %v414
        %v428 = vpack.c.b16 %v417, %v416
        %v429 = vpack.c.b16 %v419, %v418
        %v430 = vpack.c.b16 %v421, %v420
        %v431 = vpack.c.b16 %v423, %v422
        %440 = vmatprep.subr.bf16.mxu0 0
        %441 = vmatpush1.bf16.msra.mxu0 %v431
        %442 = vmatprep.subr.bf16.mxu0 0
        %443 = vmatpush1.bf16.msra.mxu0 %v430
        %444 = vmatprep.subr.bf16.mxu0 0
        %445 = vmatpush1.bf16.msra.mxu0 %v429
        %446 = vmatprep.subr.bf16.mxu0 0
        %447 = vmatpush1.bf16.msra.mxu0 %v428
        %448 = vmatprep.subr.bf16.mxu0 0
        %449 = vmatpush1.bf16.msra.mxu0 %v427
        %450 = vmatprep.subr.bf16.mxu0 0
        %451 = vmatpush1.bf16.msra.mxu0 %v426
        %452 = vmatprep.subr.bf16.mxu0 0
        %453 = vmatpush1.bf16.msra.mxu0 %v425
        %454 = vmatprep.subr.bf16.mxu0 0
        %455 = vmatpush1.bf16.msra.mxu0 %v424
        %456 = vmatprep.subr.bf16.mxu0 0
        %457 = vmatpush2.bf16.msra.mxu0 0
        %458 = vmatprep.subr.bf16.mxu0 0
        %459 = vmatpush2.bf16.msra.mxu0 0
        %460 = vmatprep.subr.bf16.mxu0 0
        %461 = vmatpush2.bf16.msra.mxu0 0
        %462 = vmatprep.subr.bf16.mxu0 0
        %463 = vmatpush2.bf16.msra.mxu0 0
        %464 = vmatprep.subr.bf16.mxu0 0
        %465 = vmatpush2.bf16.msra.mxu0 0
        %466 = vmatprep.subr.bf16.mxu0 0
        %467 = vmatpush2.bf16.msra.mxu0 0
        %468 = vmatprep.subr.bf16.mxu0 0
        %469 = vmatpush2.bf16.msra.mxu0 0
        %470 = vmatprep.subr.bf16.mxu0 0
        %471 = vmatpush2.bf16.msra.mxu0 0
        %472 = vmatprep.mubr.bf16.mxu0 0
        %473 = vmatmul.mubr.bf16.gmra.mxu0 %v359
        %v474 = vpop.f32.mrf.mxu0
        %v475 = vadd.f32 0.0, %v474
        %v476 = vpop.f32.mrf.mxu0
        %v477 = vpop.f32.mrf.mxu0
        %v478 = vadd.f32 0.0, %v477
        %v479 = vpop.f32.mrf.mxu0
        %480 = vmatprep.mubr.bf16.mxu0 0
        %481 = vmatmul.mubr.bf16.gmra.mxu0 %v360
        %v482 = vpop.f32.mrf.mxu0
        %v483 = vadd.f32 0.0, %v482
        %v484 = vpop.f32.mrf.mxu0
        %v485 = vpop.f32.mrf.mxu0
        %v486 = vadd.f32 0.0, %v485
        %v487 = vpop.f32.mrf.mxu0
        %488 = vmatprep.mubr.bf16.mxu0 0
        %489 = vmatmul.mubr.bf16.gmra.mxu0 %v361
        %v490 = vpop.f32.mrf.mxu0
        %v491 = vadd.f32 0.0, %v490
        %v492 = vpop.f32.mrf.mxu0
        %v493 = vpop.f32.mrf.mxu0
        %v494 = vadd.f32 0.0, %v493
        %v495 = vpop.f32.mrf.mxu0
        %496 = vmatprep.mubr.bf16.mxu0 0
        %497 = vmatmul.mubr.bf16.gmra.mxu0 %v362
        %v498 = vpop.f32.mrf.mxu0
        %v499 = vadd.f32 0.0, %v498
        %v500 = vpop.f32.mrf.mxu0
        %v501 = vpop.f32.mrf.mxu0
        %v502 = vadd.f32 0.0, %v501
        %v503 = vpop.f32.mrf.mxu0
        %504 = vdwg.mxu0
        %v505 = vadd.f32 %v384, %v475
        %v506 = vadd.f32 %v385, %v478
        %v507 = vadd.f32 %v386, %v483
        %v508 = vadd.f32 %v387, %v486
        %v509 = vadd.f32 %v388, %v491
        %v510 = vadd.f32 %v389, %v494
        %v511 = vadd.f32 %v390, %v499
        %v512 = vadd.f32 %v391, %v502
        %513 = vst [vmem:[%s341] sm:$0xff] %v505
        %514 = vst [vmem:[%s341 + $0x8] sm:$0xff] %v506
        %515 = vst [vmem:[%s341 + $0x10] sm:$0xff] %v507
        %516 = vst [vmem:[%s341 + $0x18] sm:$0xff] %v508
        %517 = vst [vmem:[%s341 + $0x20] sm:$0xff] %v509
        %518 = vst [vmem:[%s341 + $0x28] sm:$0xff] %v510
        %519 = vst [vmem:[%s341 + $0x30] sm:$0xff] %v511
        %520 = vst [vmem:[%s341 + $0x38] sm:$0xff] %v512
        // Predicated region
        $region65: #{tpu_custom_call.1} parent=47 // pred_check
          %p521 = pneg %p345
        $region66: #{tpu_custom_call.1} parent=47 // pred_check_branch
          %523 = sbr.rel (%p521) target = $region68
        $region67: #{tpu_custom_call.1} parent=47 // pred_region
          %s524 = smul.u32 %s30, 64
          %s525 = sshra.s32 %s524, 3
          %s526 = sand.u32 %s524, 7
          %s527 = smul.addr %s525, 4
          %s528 = scalar_lea.vmem [#allocation6], %s527
          %v529 = vld [vmem:[%s528] sm:$0xf]
          %v530 = vld [vmem:[%s528 + $0x4] sm:$0xf]
          %v531 = vld [vmem:[%s528 + $0x8] sm:$0xf]
          %v532 = vld [vmem:[%s528 + $0xc] sm:$0xf]
          %v533 = vld [vmem:[%s528 + $0x10] sm:$0xf]
          %v534 = vld [vmem:[%s528 + $0x14] sm:$0xf]
          %v535 = vld [vmem:[%s528 + $0x18] sm:$0xf]
          %v536 = vld [vmem:[%s528 + $0x1c] sm:$0xf]
          %v537 = vunpack.c.l.bf16 %v529
          %v538 = vunpack.c.l.bf16 %v530
          %v539 = vunpack.c.l.bf16 %v531
          %v540 = vunpack.c.l.bf16 %v532
          %v541 = vunpack.c.l.bf16 %v533
          %v542 = vunpack.c.l.bf16 %v534
          %v543 = vunpack.c.l.bf16 %v535
          %v544 = vunpack.c.l.bf16 %v536
          %s545 = sld [smem:[#allocation2]]
          %s546 = sadd.f32 %s545, 1.0
          %v547 = vstv %s546
          %v548 = vmul.f32 %v547, %v537
          %v549 = vmul.f32 %v547, %v538
          %v550 = vmul.f32 %v547, %v539
          %v551 = vmul.f32 %v547, %v540
          %v552 = vmul.f32 %v547, %v541
          %v553 = vmul.f32 %v547, %v542
          %v554 = vmul.f32 %v547, %v543
          %v555 = vmul.f32 %v547, %v544
          %v556 = vld [vmem:[%s341] sm:$0xff]
          %v557 = vld [vmem:[%s341 + $0x8] sm:$0xff]
          %v558 = vld [vmem:[%s341 + $0x10] sm:$0xff]
          %v559 = vld [vmem:[%s341 + $0x18] sm:$0xff]
          %v560 = vld [vmem:[%s341 + $0x20] sm:$0xff]
          %v561 = vld [vmem:[%s341 + $0x28] sm:$0xff]
          %v562 = vld [vmem:[%s341 + $0x30] sm:$0xff]
          %v563 = vld [vmem:[%s341 + $0x38] sm:$0xff]
          %v564 = vadd.f32 %v548, %v556
          %v565 = vadd.f32 %v549, %v557
          %v566 = vadd.f32 %v550, %v558
          %v567 = vadd.f32 %v551, %v559
          %v568 = vadd.f32 %v552, %v560
          %v569 = vadd.f32 %v553, %v561
          %v570 = vadd.f32 %v554, %v562
          %v571 = vadd.f32 %v555, %v563
          %v572 = vld [vmem:[%s4] sm:$0x1]
          %v574 = vlaneseq
          %v575 = vshrl.u32 %v574, 7
          %v576 = vsub.s32 0, %v575
          %v577 = vrot.slane %v572, %v576
          %v579 = vadd.f32 %v564, %v577
          %v580 = vadd.f32 %v565, %v577
          %v581 = vadd.f32 %v566, %v577
          %v582 = vadd.f32 %v567, %v577
          %v583 = vadd.f32 %v568, %v577
          %v584 = vadd.f32 %v569, %v577
          %v585 = vadd.f32 %v570, %v577
          %v586 = vadd.f32 %v571, %v577
          %v587 = vmax.f32 %v579, 0.0
          %v588 = vmax.f32 %v580, 0.0
          %v589 = vmax.f32 %v581, 0.0
          %v590 = vmax.f32 %v582, 0.0
          %v591 = vmax.f32 %v583, 0.0
          %v592 = vmax.f32 %v584, 0.0
          %v593 = vmax.f32 %v585, 0.0
          %v594 = vmax.f32 %v586, 0.0
          %v595 = vld [vmem:[#allocation8] sm:$0xff]
          %v596 = vld [vmem:[#allocation8 + $0x8] sm:$0xff]
          %v597 = vld [vmem:[#allocation8 + $0x10] sm:$0xff]
          %v598 = vld [vmem:[#allocation8 + $0x18] sm:$0xff]
          %v599 = vld [vmem:[#allocation8 + $0x20] sm:$0xff]
          %v600 = vld [vmem:[#allocation8 + $0x28] sm:$0xff]
          %v601 = vld [vmem:[#allocation8 + $0x30] sm:$0xff]
          %v602 = vld [vmem:[#allocation8 + $0x38] sm:$0xff]
          %v603 = vld [vmem:[#allocation8 + $0x40] sm:$0xff]
          %v604 = vld [vmem:[#allocation8 + $0x48] sm:$0xff]
          %v605 = vld [vmem:[#allocation8 + $0x50] sm:$0xff]
          %v606 = vld [vmem:[#allocation8 + $0x58] sm:$0xff]
          %v607 = vld [vmem:[#allocation8 + $0x60] sm:$0xff]
          %v608 = vld [vmem:[#allocation8 + $0x68] sm:$0xff]
          %v609 = vld [vmem:[#allocation8 + $0x70] sm:$0xff]
          %v610 = vld [vmem:[#allocation8 + $0x78] sm:$0xff]
          %v611 = vld [vmem:[%s5] sm:$0x1]
          %v613 = vlaneseq
          %v614 = vshrl.u32 %v613, 7
          %v615 = vsub.s32 0, %v614
          %v616 = vrot.slane %v611, %v615
          %618 = vmatprep.subr.mxu0 0.0
          %619 = vmatpush1.msra.mxu0 %v610
          %620 = vmatprep.subr.mxu0 0.0
          %621 = vmatpush1.msra.mxu0 %v609
          %622 = vmatprep.subr.mxu0 0.0
          %623 = vmatpush1.msra.mxu0 %v608
          %624 = vmatprep.subr.mxu0 0.0
          %625 = vmatpush1.msra.mxu0 %v607
          %626 = vmatprep.subr.mxu0 0.0
          %627 = vmatpush1.msra.mxu0 %v606
          %628 = vmatprep.subr.mxu0 0.0
          %629 = vmatpush1.msra.mxu0 %v605
          %630 = vmatprep.subr.mxu0 0.0
          %631 = vmatpush1.msra.mxu0 %v604
          %632 = vmatprep.subr.mxu0 0.0
          %633 = vmatpush1.msra.mxu0 %v603
          %634 = vmatprep.subr.mxu0 0.0
          %635 = vmatpush1.msra.mxu0 %v602
          %636 = vmatprep.subr.mxu0 0.0
          %637 = vmatpush1.msra.mxu0 %v601
          %638 = vmatprep.subr.mxu0 0.0
          %639 = vmatpush1.msra.mxu0 %v600
          %640 = vmatprep.subr.mxu0 0.0
          %641 = vmatpush1.msra.mxu0 %v599
          %642 = vmatprep.subr.mxu0 0.0
          %643 = vmatpush1.msra.mxu0 %v598
          %644 = vmatprep.subr.mxu0 0.0
          %645 = vmatpush1.msra.mxu0 %v597
          %646 = vmatprep.subr.mxu0 0.0
          %647 = vmatpush1.msra.mxu0 %v596
          %648 = vmatprep.subr.mxu0 0.0
          %649 = vmatpush1.msra.mxu0 %v595
          %650 = vmatprep.subr.mxu0 0.0
          %651 = vmatpush2.msra.mxu0 0.0
          %652 = vmatprep.subr.mxu0 0.0
          %653 = vmatpush2.msra.mxu0 0.0
          %654 = vmatprep.subr.mxu0 0.0
          %655 = vmatpush2.msra.mxu0 0.0
          %656 = vmatprep.subr.mxu0 0.0
          %657 = vmatpush2.msra.mxu0 0.0
          %658 = vmatprep.subr.mxu0 0.0
          %659 = vmatpush2.msra.mxu0 0.0
          %660 = vmatprep.subr.mxu0 0.0
          %661 = vmatpush2.msra.mxu0 0.0
          %662 = vmatprep.subr.mxu0 0.0
          %663 = vmatpush2.msra.mxu0 0.0
          %664 = vmatprep.subr.mxu0 0.0
          %665 = vmatpush2.msra.mxu0 0.0
          %666 = vmatprep.subr.mxu0 0.0
          %667 = vmatpush2.msra.mxu0 0.0
          %668 = vmatprep.subr.mxu0 0.0
          %669 = vmatpush2.msra.mxu0 0.0
          %670 = vmatprep.subr.mxu0 0.0
          %671 = vmatpush2.msra.mxu0 0.0
          %672 = vmatprep.subr.mxu0 0.0
          %673 = vmatpush2.msra.mxu0 0.0
          %674 = vmatprep.subr.mxu0 0.0
          %675 = vmatpush2.msra.mxu0 0.0
          %676 = vmatprep.subr.mxu0 0.0
          %677 = vmatpush2.msra.mxu0 0.0
          %678 = vmatprep.subr.mxu0 0.0
          %679 = vmatpush2.msra.mxu0 0.0
          %680 = vmatprep.subr.mxu0 0.0
          %681 = vmatpush2.msra.mxu0 0.0
          %682 = vmatprep.mubr.f32.mxu0 0.0
          %683 = vmatmul.mubr.f32.gmra.mxu0 %v587
          %v684 = vpop.f32.mrf.mxu0
          %v685 = vadd.f32 %v616, %v684
          %v686 = vpop.f32.mrf.mxu0
          %687 = vmatprep.mubr.f32.mxu0 0.0
          %688 = vmatmul.mubr.f32.gmra.mxu0 %v588
          %v689 = vpop.f32.mrf.mxu0
          %v690 = vadd.f32 %v616, %v689
          %v691 = vpop.f32.mrf.mxu0
          %692 = vmatprep.mubr.f32.mxu0 0.0
          %693 = vmatmul.mubr.f32.gmra.mxu0 %v589
          %v694 = vpop.f32.mrf.mxu0
          %v695 = vadd.f32 %v616, %v694
          %v696 = vpop.f32.mrf.mxu0
          %697 = vmatprep.mubr.f32.mxu0 0.0
          %698 = vmatmul.mubr.f32.gmra.mxu0 %v590
          %v699 = vpop.f32.mrf.mxu0
          %v700 = vadd.f32 %v616, %v699
          %v701 = vpop.f32.mrf.mxu0
          %702 = vmatprep.mubr.f32.mxu0 0.0
          %703 = vmatmul.mubr.f32.gmra.mxu0 %v591
          %v704 = vpop.f32.mrf.mxu0
          %v705 = vadd.f32 %v616, %v704
          %v706 = vpop.f32.mrf.mxu0
          %707 = vmatprep.mubr.f32.mxu0 0.0
          %708 = vmatmul.mubr.f32.gmra.mxu0 %v592
          %v709 = vpop.f32.mrf.mxu0
          %v710 = vadd.f32 %v616, %v709
          %v711 = vpop.f32.mrf.mxu0
          %712 = vmatprep.mubr.f32.mxu0 0.0
          %713 = vmatmul.mubr.f32.gmra.mxu0 %v593
          %v714 = vpop.f32.mrf.mxu0
          %v715 = vadd.f32 %v616, %v714
          %v716 = vpop.f32.mrf.mxu0
          %717 = vmatprep.mubr.f32.mxu0 0.0
          %718 = vmatmul.mubr.f32.gmra.mxu0 %v594
          %v719 = vpop.f32.mrf.mxu0
          %v720 = vadd.f32 %v616, %v719
          %v721 = vpop.f32.mrf.mxu0
          %722 = vdwg.mxu0
          %v723 = vmax.f32 %v685, 0.0
          %v724 = vmax.f32 %v690, 0.0
          %v725 = vmax.f32 %v695, 0.0
          %v726 = vmax.f32 %v700, 0.0
          %v727 = vmax.f32 %v705, 0.0
          %v728 = vmax.f32 %v710, 0.0
          %v729 = vmax.f32 %v715, 0.0
          %v730 = vmax.f32 %v720, 0.0
          %v731 = vld [vmem:[%s6] sm:$0x1]
          %v733 = vlaneseq
          %v734 = vshrl.u32 %v733, 7
          %v735 = vsub.s32 0, %v734
          %v736 = vrot.slane %v731, %v735
          %v738 = vadd.f32 %v723, %v736
          %v739 = vadd.f32 %v724, %v736
          %v740 = vadd.f32 %v725, %v736
          %v741 = vadd.f32 %v726, %v736
          %v742 = vadd.f32 %v727, %v736
          %v743 = vadd.f32 %v728, %v736
          %v744 = vadd.f32 %v729, %v736
          %v745 = vadd.f32 %v730, %v736
          %v746 = vmax.f32 %v738, 0.0
          %v747 = vmax.f32 %v739, 0.0
          %v748 = vmax.f32 %v740, 0.0
          %v749 = vmax.f32 %v741, 0.0
          %v750 = vmax.f32 %v742, 0.0
          %v751 = vmax.f32 %v743, 0.0
          %v752 = vmax.f32 %v744, 0.0
          %v753 = vmax.f32 %v745, 0.0
          %754 = vst [vmem:[%s341] sm:$0xff] %v746
          %755 = vst [vmem:[%s341 + $0x8] sm:$0xff] %v747
          %756 = vst [vmem:[%s341 + $0x10] sm:$0xff] %v748
          %757 = vst [vmem:[%s341 + $0x18] sm:$0xff] %v749
          %758 = vst [vmem:[%s341 + $0x20] sm:$0xff] %v750
          %759 = vst [vmem:[%s341 + $0x28] sm:$0xff] %v751
          %760 = vst [vmem:[%s341 + $0x30] sm:$0xff] %v752
          %761 = vst [vmem:[%s341 + $0x38] sm:$0xff] %v753
        $region68: #{tpu_custom_call.1} parent=47 // pred_fallthru
          _
        %s762 = sand.u32 %s200, 1
        %s763 = scalar_lea.sflag [#allocation5], %s762
        %s764 = sand.u32 %s200, 1
        %s765 = smul.addr %s764, 64
        %s766 = scalar_lea.vmem [#allocation9], %s765
        // Predicated region
        $region69: #{tpu_custom_call.1} parent=47 // pred_check
          %p767 = pneg %p210
        $region70: #{tpu_custom_call.1} parent=47 // pred_check_branch
          %769 = sbr.rel (%p767) target = $region72
        $region71: #{tpu_custom_call.1} parent=47 // pred_region
          %s770 = smul.u32 8, %s30
          %s772 = ssub.s32 1024, 1024
          %773 = vsyncadd %s763, %s772
          %s774 = smul.addr %s770, 128
          %s775 = scalar_lea.hbm %s7, %s774
          %s776 = sshll.u32 %s766, 4
          %s777 = int_to_ptr.vmem [resolvable:$true] %s776
          %782 = dma.vmem_to_hbm [thread:$0]  %s777, 1024, %s775, %s763, 128, 128, 8
        $region72: #{tpu_custom_call.1} parent=47 // pred_fallthru
          _
      $region48: #{tpu_custom_call.1} parent=5 // pred_fallthru
        _
      %p783 = scmp.le.s32.totalorder 2, %s21
      // Predicated region
      $region73: #{tpu_custom_call.1} parent=5 // pred_check
        %p784 = pneg %p783
      $region74: #{tpu_custom_call.1} parent=5 // pred_check_branch
        %786 = sbr.rel (%p784) target = $region76
      $region75: #{tpu_custom_call.1} parent=5 // pred_region
        %s787 = ssub.s32 %s21, 2
        // Predicated region
        $region77: #{tpu_custom_call.1} parent=75 // pred_check
          %p788 = pneg %p216
        $region78: #{tpu_custom_call.1} parent=75 // pred_check_branch
          %790 = sbr.rel (%p788) target = $region80
        $region79: #{tpu_custom_call.1} parent=75 // pred_region
          %s791 = sand.u32 %s201, 1
          %s792 = scalar_lea.sflag [#allocation5], %s791
          %s793 = sand.u32 %s201, 1
          %s794 = smul.addr %s793, 64
          %s795 = scalar_lea.vmem [#allocation9], %s794
          %796 = dma.done %s792, 1024
        $region80: #{tpu_custom_call.1} parent=75 // pred_fallthru
          _
      $region76: #{tpu_custom_call.1} parent=5 // pred_fallthru
        _
    $region6: #{tpu_custom_call.1} parent=1 // loop_footer
      %s25 = sadd.s32 1, %s21
    $region7: #{tpu_custom_call.1} parent=1 // loop_footer_branch
      %20 = sbr.rel target = $region3
    $region8: #{tpu_custom_call.1} parent=1 // loop_exit
      _
    %797 = vsyncpa [#allocation4], 1
    %s798 = scalar_lea.sflag [#allocation4], 1
    %799 = vsyncpa %s798, 1
    %800 = vsyncpa [#allocation7], 1
    %801 = vsyncpa [#allocation5], 1
    %s802 = scalar_lea.sflag [#allocation5], 1
    %803 = vsyncpa %s802, 1

</llo_original>
